<compile_context>
chip_gen: v6e
topology: v6e:2x2x1
jax: 0.10.0
libtpu: 0.0.40
codegen_flags: <defaults>
</compile_context>

<pallas_src>
import functools

import numpy as np
import jax
import jax.numpy as jnp
from jax.experimental import pallas as pl
from jax.experimental.pallas import tpu as pltpu


def _round_up(x, m):
    return (x + m - 1) // m * m


def _largest_divisor_leq(n, limit):
    limit = max(1, min(n, limit))
    for d in range(limit, 0, -1):
        if n % d == 0:
            return d
    return 1


def _vmem_budget():
    """(live-block budget, vmem_limit_bytes) sized per TPU generation."""
    try:
        cap = int(pltpu.get_tpu_info().vmem_capacity_bytes)  # 128 MiB v5e/v6e, 64 MiB v7x
    except Exception:
        cap = 64 << 20                                       # conservative fallback
    vmem_limit = min(cap // 2, 64 << 20)                     # scoped request with headroom
    block_budget = (vmem_limit * 3) // 4                     # live (double-buffered) blocks
    return block_budget, vmem_limit


def _choose_depth_tile(D, H, W, scale, itemsize, budget_bytes):
    """Largest divisor of D whose (layout-padded, double-buffered) blocks fit the budget."""
    s = scale

    def live_bytes(dt):
        in_blk = (s ** 3) * dt * _round_up(H, 8) * _round_up(W, 128) * itemsize
        out_blk = dt * s * _round_up(H, 8) * _round_up(s * s * W, 128) * itemsize
        return 2 * (in_blk + out_blk)        # x2: input + output are double-buffered

    for dt in range(D, 0, -1):
        if D % dt == 0 and live_bytes(dt) <= budget_bytes:
            return dt
    return 1   # even dt=1 over budget: fall back and let the compiler cope


def _pixel_shuffle3d_kernel(x_ref, pw_ref, o_ref, *, scale, H, W):
    """Per grid point (b, n, d_blk):
       x_ref : (s^3, Dt, H, W)    all s^3 source channels of out-channel n, Dt depths
       pw_ref: (Ws, Ws)           0/1 lane permutation: col s3*W + w -> w*s + s3
       o_ref : (Dt, s, H, s*Ws)   contiguous output view; last axis flattens (s2, w, s3)
    """
    s = scale
    Ws = W * s
    Dt = x_ref.shape[1]
    pw = pw_ref[...]                                      # tiny constant, stays resident

    for s1 in range(s):              # output-depth offset -> separate axis of o_ref
        for s2 in range(s):          # output-height offset -> contiguous lane range
            # Gather the s width-planes of this (s1, s2): (Dt, H, W*s), col = s3*W + w.
            cat = jnp.concatenate(
                [x_ref[s1 * s * s + s2 * s + s3] for s3 in range(s)], axis=-1)
            # Lane interleave s3*W+w -> w*s+s3: ONE 2-D MXU matmul (exact 0/1 permutation),
            # no broadcast, no batched einsum, no forced f32 upcast of the data.
            y = jnp.dot(cat.reshape(Dt * H, Ws).astype(pw.dtype), pw,
                        preferred_element_type=jnp.float32)
            # Unit-stride store into lane range [s2*Ws, (s2+1)*Ws).
            o_ref[:, s1, :, s2 * Ws:(s2 + 1) * Ws] = (
                y.reshape(Dt, H, Ws).astype(o_ref.dtype))


def _make_pw(W, scale, dtype):
    """PW[s3*W + w, w*s + s3] = 1 — lane-interleave permutation matrix."""
    s = scale
    idx = np.arange(W * s)
    s3 = idx // W
    w = idx % W
    PW = np.zeros((W * s, W * s), dtype=np.float32)
    PW[idx, w * s + s3] = 1.0
    return jnp.asarray(PW, dtype=dtype)


def pixel_shuffle3d(x, scale):
    B, C, D, H, W = x.shape
    s = scale
    s3 = s ** 3
    assert C % s3 == 0, "channels must be divisible by scale**3"
    n_out = C // s3
    Ws = W * s

    # Free (contiguous) view: split the channel axis.
    x6 = x.reshape(B, n_out, s3, D, H, W)

    budget, vmem_limit = _vmem_budget()
    itemsize = np.dtype(x.dtype).itemsize
    Dt = _choose_depth_tile(D, H, W, s, itemsize, budget)
    # Keep >=2 grid steps when possible so a v7x megacore can split the work.
    if B * n_out * (D // Dt) < 2:
        Dt = _largest_divisor_leq(D, max(1, D // 2))

    mm_dtype = x.dtype if jnp.issubdtype(x.dtype, jnp.floating) else jnp.float32
    PW = _make_pw(W, s, mm_dtype)

    kernel = functools.partial(_pixel_shuffle3d_kernel, scale=s, H=H, W=W)

    grid_spec = pltpu.PrefetchScalarGridSpec(
        num_scalar_prefetch=0,
        grid=(B, n_out, D // Dt),
        in_specs=[
            # One contiguous (s^3, Dt, H, W) HBM slab per step.
            # (A lane-dense (s^3, Dt, H*W) variant needs an in-kernel lane->sublane
            #  relayout before the K=W*s matmul; kept out for lowering safety.)
            pl.BlockSpec((None, None, s3, Dt, H, W),
                         lambda b, n, d: (b, n, 0, d, 0, 0)),
            # Tiny constant permutation matrix (same block every step).
            pl.BlockSpec((Ws, Ws), lambda b, n, d: (0, 0)),
        ],
        out_specs=pl.BlockSpec((None, None, Dt, s, H, s * Ws),
                               lambda b, n, d: (b, n, d, 0, 0, 0)),
    )

    out_view = pl.pallas_call(
        kernel,
        out_shape=jax.ShapeDtypeStruct((B, n_out, D, s, H, s * Ws), x.dtype),
        grid_spec=grid_spec,
        compiler_params=pltpu.CompilerParams(
            dimension_semantics=("parallel", "parallel", "parallel"),
            vmem_limit_bytes=vmem_limit,
        ),
    )(x6, PW)

    # (B, n_out, D, s, H, s*W*s) -> (B, n_out, D*s, H*s, W*s): contiguous, zero-copy.
    return out_view.reshape(B, n_out, D * s, H * s, W * s)


def pixel_shuffle3d_ref(x, scale):
    """Pure-JAX reference identical to the PyTorch forward."""
    B, C, D, H, W = x.shape
    n_out = C // scale ** 3
    xv = x.reshape(B, n_out, scale, scale, scale, D, H, W)
    out = jnp.transpose(xv, (0, 1, 5, 2, 6, 3, 7, 4))
    return out.reshape(B, n_out, D * scale, H * scale, W * scale)


if __name__ == "__main__":
    key = jax.random.PRNGKey(0)
    scale = 2
    B, n_out, D, H, W = 2, 2, 4, 8, 8
    C = n_out * scale ** 3  # 16
    x = jax.random.normal(key, (B, C, D, H, W), dtype=jnp.float32)

    out = jax.block_until_ready(pixel_shuffle3d(x, scale))
    ref = jax.block_until_ready(pixel_shuffle3d_ref(x, scale))

    assert out.shape == ref.shape, (out.shape, ref.shape)
    np.testing.assert_allclose(np.asarray(out), np.asarray(ref), rtol=0, atol=0)

    print("KERNEL_OK")
</pallas_src>

<mosaic_0001>
module attributes {stable_mosaic.version = 11 : i64} {
  func.func @_pixel_shuffle3d_kernel(%arg0: i32, %arg1: i32, %arg2: i32, %arg3: memref<1x1x8x4x8x8xf32, #tpu.memory_space<vmem>>, %arg4: memref<16x16xf32, #tpu.memory_space<vmem>>, %arg5: memref<1x1x4x2x8x32xf32, #tpu.memory_space<vmem>>) attributes {dimension_semantics = [#tpu.dimension_semantics<parallel>, #tpu.dimension_semantics<parallel>, #tpu.dimension_semantics<parallel>], iteration_bounds = array<i64: 2, 2, 1>, scalar_prefetch = 0 : i64, scratch_operands = 0 : i64, tpu.core_type = #tpu.core_type<tc>, window_params = [{transform_indices = @transform_0, window_bounds = array<i64: 1, 1, 8, 4, 8, 8>}, {pipeline_mode = #tpu.pipeline_mode<synchronous>, transform_indices = @transform_1, window_bounds = array<i64: 16, 16>}, {transform_indices = @transform_2, window_bounds = array<i64: 1, 1, 4, 2, 8, 32>}]} {
    %c0 = arith.constant 0 : index
    %c0_0 = arith.constant 0 : index
    %0 = vector.load %arg4[%c0, %c0_0] : memref<16x16xf32, #tpu.memory_space<vmem>>, vector<16x16xf32>
    %c0_1 = arith.constant 0 : index
    %c0_2 = arith.constant 0 : index
    %c0_3 = arith.constant 0 : index
    %c0_4 = arith.constant 0 : index
    %c0_5 = arith.constant 0 : index
    %c0_6 = arith.constant 0 : index
    %1 = vector.load %arg3[%c0_1, %c0_2, %c0_3, %c0_4, %c0_5, %c0_6] : memref<1x1x8x4x8x8xf32, #tpu.memory_space<vmem>>, vector<1x1x1x4x8x8xf32>
    %2 = vector.shape_cast %1 : vector<1x1x1x4x8x8xf32> to vector<4x8x8xf32>
    %c0_7 = arith.constant 0 : index
    %c0_8 = arith.constant 0 : index
    %c1 = arith.constant 1 : index
    %c0_9 = arith.constant 0 : index
    %c0_10 = arith.constant 0 : index
    %c0_11 = arith.constant 0 : index
    %3 = vector.load %arg3[%c0_7, %c0_8, %c1, %c0_9, %c0_10, %c0_11] : memref<1x1x8x4x8x8xf32, #tpu.memory_space<vmem>>, vector<1x1x1x4x8x8xf32>
    %4 = vector.shape_cast %3 : vector<1x1x1x4x8x8xf32> to vector<4x8x8xf32>
    %5 = tpu.concatenate %2, %4 in 2 : vector<4x8x8xf32>, vector<4x8x8xf32> -> vector<4x8x16xf32>
    %6 = vector.shape_cast %5 : vector<4x8x16xf32> to vector<32x16xf32>
    %cst = arith.constant dense<0.000000e+00> : vector<32x16xf32>
    %7 = tpu.matmul %6, %0, %cst {dimension_numbers = #tpu.dot_dimension_numbers<[1], [0], [0], [1], [0, 0, 1, 1], [], []>} : vector<32x16xf32>, vector<16x16xf32>, vector<32x16xf32> -> vector<32x16xf32>
    %8 = vector.shape_cast %7 : vector<32x16xf32> to vector<4x8x16xf32>
    %c0_12 = arith.constant 0 : index
    %c0_13 = arith.constant 0 : index
    %c0_14 = arith.constant 0 : index
    %c0_15 = arith.constant 0 : index
    %c0_16 = arith.constant 0 : index
    %c0_17 = arith.constant 0 : index
    %9 = vector.load %arg5[%c0_12, %c0_13, %c0_14, %c0_15, %c0_16, %c0_17] : memref<1x1x4x2x8x32xf32, #tpu.memory_space<vmem>>, vector<1x1x4x1x8x16xf32>
    %10 = vector.shape_cast %9 : vector<1x1x4x1x8x16xf32> to vector<4x8x16xf32>
    %11 = vector.shape_cast %8 : vector<4x8x16xf32> to vector<1x1x4x1x8x16xf32>
    tpu.vector_store %arg5[%c0_12, %c0_13, %c0_14, %c0_15, %c0_16, %c0_17], %11 {strides = array<i32>} : memref<1x1x4x2x8x32xf32, #tpu.memory_space<vmem>>, vector<1x1x4x1x8x16xf32>,
    %c0_18 = arith.constant 0 : index
    %c0_19 = arith.constant 0 : index
    %c2 = arith.constant 2 : index
    %c0_20 = arith.constant 0 : index
    %c0_21 = arith.constant 0 : index
    %c0_22 = arith.constant 0 : index
    %12 = vector.load %arg3[%c0_18, %c0_19, %c2, %c0_20, %c0_21, %c0_22] : memref<1x1x8x4x8x8xf32, #tpu.memory_space<vmem>>, vector<1x1x1x4x8x8xf32>
    %13 = vector.shape_cast %12 : vector<1x1x1x4x8x8xf32> to vector<4x8x8xf32>
    %c0_23 = arith.constant 0 : index
    %c0_24 = arith.constant 0 : index
    %c3 = arith.constant 3 : index
    %c0_25 = arith.constant 0 : index
    %c0_26 = arith.constant 0 : index
    %c0_27 = arith.constant 0 : index
    %14 = vector.load %arg3[%c0_23, %c0_24, %c3, %c0_25, %c0_26, %c0_27] : memref<1x1x8x4x8x8xf32, #tpu.memory_space<vmem>>, vector<1x1x1x4x8x8xf32>
    %15 = vector.shape_cast %14 : vector<1x1x1x4x8x8xf32> to vector<4x8x8xf32>
    %16 = tpu.concatenate %13, %15 in 2 : vector<4x8x8xf32>, vector<4x8x8xf32> -> vector<4x8x16xf32>
    %17 = vector.shape_cast %16 : vector<4x8x16xf32> to vector<32x16xf32>
    %cst_28 = arith.constant dense<0.000000e+00> : vector<32x16xf32>
    %18 = tpu.matmul %17, %0, %cst_28 {dimension_numbers = #tpu.dot_dimension_numbers<[1], [0], [0], [1], [0, 0, 1, 1], [], []>} : vector<32x16xf32>, vector<16x16xf32>, vector<32x16xf32> -> vector<32x16xf32>
    %19 = vector.shape_cast %18 : vector<32x16xf32> to vector<4x8x16xf32>
    %c0_29 = arith.constant 0 : index
    %c0_30 = arith.constant 0 : index
    %c0_31 = arith.constant 0 : index
    %c0_32 = arith.constant 0 : index
    %c0_33 = arith.constant 0 : index
    %c16 = arith.constant 16 : index
    %20 = vector.load %arg5[%c0_29, %c0_30, %c0_31, %c0_32, %c0_33, %c16] : memref<1x1x4x2x8x32xf32, #tpu.memory_space<vmem>>, vector<1x1x4x1x8x16xf32>
    %21 = vector.shape_cast %20 : vector<1x1x4x1x8x16xf32> to vector<4x8x16xf32>
    %22 = vector.shape_cast %19 : vector<4x8x16xf32> to vector<1x1x4x1x8x16xf32>
    tpu.vector_store %arg5[%c0_29, %c0_30, %c0_31, %c0_32, %c0_33, %c16], %22 {strides = array<i32>} : memref<1x1x4x2x8x32xf32, #tpu.memory_space<vmem>>, vector<1x1x4x1x8x16xf32>,
    %c0_34 = arith.constant 0 : index
    %c0_35 = arith.constant 0 : index
    %c4 = arith.constant 4 : index
    %c0_36 = arith.constant 0 : index
    %c0_37 = arith.constant 0 : index
    %c0_38 = arith.constant 0 : index
    %23 = vector.load %arg3[%c0_34, %c0_35, %c4, %c0_36, %c0_37, %c0_38] : memref<1x1x8x4x8x8xf32, #tpu.memory_space<vmem>>, vector<1x1x1x4x8x8xf32>
    %24 = vector.shape_cast %23 : vector<1x1x1x4x8x8xf32> to vector<4x8x8xf32>
    %c0_39 = arith.constant 0 : index
    %c0_40 = arith.constant 0 : index
    %c5 = arith.constant 5 : index
    %c0_41 = arith.constant 0 : index
    %c0_42 = arith.constant 0 : index
    %c0_43 = arith.constant 0 : index
    %25 = vector.load %arg3[%c0_39, %c0_40, %c5, %c0_41, %c0_42, %c0_43] : memref<1x1x8x4x8x8xf32, #tpu.memory_space<vmem>>, vector<1x1x1x4x8x8xf32>
    %26 = vector.shape_cast %25 : vector<1x1x1x4x8x8xf32> to vector<4x8x8xf32>
    %27 = tpu.concatenate %24, %26 in 2 : vector<4x8x8xf32>, vector<4x8x8xf32> -> vector<4x8x16xf32>
    %28 = vector.shape_cast %27 : vector<4x8x16xf32> to vector<32x16xf32>
    %cst_44 = arith.constant dense<0.000000e+00> : vector<32x16xf32>
    %29 = tpu.matmul %28, %0, %cst_44 {dimension_numbers = #tpu.dot_dimension_numbers<[1], [0], [0], [1], [0, 0, 1, 1], [], []>} : vector<32x16xf32>, vector<16x16xf32>, vector<32x16xf32> -> vector<32x16xf32>
    %30 = vector.shape_cast %29 : vector<32x16xf32> to vector<4x8x16xf32>
    %c0_45 = arith.constant 0 : index
    %c0_46 = arith.constant 0 : index
    %c0_47 = arith.constant 0 : index
    %c1_48 = arith.constant 1 : index
    %c0_49 = arith.constant 0 : index
    %c0_50 = arith.constant 0 : index
    %31 = vector.load %arg5[%c0_45, %c0_46, %c0_47, %c1_48, %c0_49, %c0_50] : memref<1x1x4x2x8x32xf32, #tpu.memory_space<vmem>>, vector<1x1x4x1x8x16xf32>
    %32 = vector.shape_cast %31 : vector<1x1x4x1x8x16xf32> to vector<4x8x16xf32>
    %33 = vector.shape_cast %30 : vector<4x8x16xf32> to vector<1x1x4x1x8x16xf32>
    tpu.vector_store %arg5[%c0_45, %c0_46, %c0_47, %c1_48, %c0_49, %c0_50], %33 {strides = array<i32>} : memref<1x1x4x2x8x32xf32, #tpu.memory_space<vmem>>, vector<1x1x4x1x8x16xf32>,
    %c0_51 = arith.constant 0 : index
    %c0_52 = arith.constant 0 : index
    %c6 = arith.constant 6 : index
    %c0_53 = arith.constant 0 : index
    %c0_54 = arith.constant 0 : index
    %c0_55 = arith.constant 0 : index
    %34 = vector.load %arg3[%c0_51, %c0_52, %c6, %c0_53, %c0_54, %c0_55] : memref<1x1x8x4x8x8xf32, #tpu.memory_space<vmem>>, vector<1x1x1x4x8x8xf32>
    %35 = vector.shape_cast %34 : vector<1x1x1x4x8x8xf32> to vector<4x8x8xf32>
    %c0_56 = arith.constant 0 : index
    %c0_57 = arith.constant 0 : index
    %c7 = arith.constant 7 : index
    %c0_58 = arith.constant 0 : index
    %c0_59 = arith.constant 0 : index
    %c0_60 = arith.constant 0 : index
    %36 = vector.load %arg3[%c0_56, %c0_57, %c7, %c0_58, %c0_59, %c0_60] : memref<1x1x8x4x8x8xf32, #tpu.memory_space<vmem>>, vector<1x1x1x4x8x8xf32>
    %37 = vector.shape_cast %36 : vector<1x1x1x4x8x8xf32> to vector<4x8x8xf32>
    %38 = tpu.concatenate %35, %37 in 2 : vector<4x8x8xf32>, vector<4x8x8xf32> -> vector<4x8x16xf32>
    %39 = vector.shape_cast %38 : vector<4x8x16xf32> to vector<32x16xf32>
    %cst_61 = arith.constant dense<0.000000e+00> : vector<32x16xf32>
    %40 = tpu.matmul %39, %0, %cst_61 {dimension_numbers = #tpu.dot_dimension_numbers<[1], [0], [0], [1], [0, 0, 1, 1], [], []>} : vector<32x16xf32>, vector<16x16xf32>, vector<32x16xf32> -> vector<32x16xf32>
    %41 = vector.shape_cast %40 : vector<32x16xf32> to vector<4x8x16xf32>
    %c0_62 = arith.constant 0 : index
    %c0_63 = arith.constant 0 : index
    %c0_64 = arith.constant 0 : index
    %c1_65 = arith.constant 1 : index
    %c0_66 = arith.constant 0 : index
    %c16_67 = arith.constant 16 : index
    %42 = vector.load %arg5[%c0_62, %c0_63, %c0_64, %c1_65, %c0_66, %c16_67] : memref<1x1x4x2x8x32xf32, #tpu.memory_space<vmem>>, vector<1x1x4x1x8x16xf32>
    %43 = vector.shape_cast %42 : vector<1x1x4x1x8x16xf32> to vector<4x8x16xf32>
    %44 = vector.shape_cast %41 : vector<4x8x16xf32> to vector<1x1x4x1x8x16xf32>
    tpu.vector_store %arg5[%c0_62, %c0_63, %c0_64, %c1_65, %c0_66, %c16_67], %44 {strides = array<i32>} : memref<1x1x4x2x8x32xf32, #tpu.memory_space<vmem>>, vector<1x1x4x1x8x16xf32>,
    return
  }
  func.func @transform_0(%arg0: i32, %arg1: i32, %arg2: i32) -> (i32, i32, i32, i32, i32, i32) {
    %c0_i32 = arith.constant 0 : i32
    %c0_i32_0 = arith.constant 0 : i32
    %c0_i32_1 = arith.constant 0 : i32
    %c0_i32_2 = arith.constant 0 : i32
    return %arg0, %arg1, %c0_i32, %arg2, %c0_i32_0, %c0_i32_1 : i32, i32, i32, i32, i32, i32
  }
  func.func @transform_1(%arg0: i32, %arg1: i32, %arg2: i32) -> (i32, i32) {
    %c0_i32 = arith.constant 0 : i32
    %c0_i32_0 = arith.constant 0 : i32
    %c0_i32_1 = arith.constant 0 : i32
    return %c0_i32, %c0_i32_0 : i32, i32
  }
  func.func @transform_2(%arg0: i32, %arg1: i32, %arg2: i32) -> (i32, i32, i32, i32, i32, i32) {
    %c0_i32 = arith.constant 0 : i32
    %c0_i32_0 = arith.constant 0 : i32
    %c0_i32_1 = arith.constant 0 : i32
    %c0_i32_2 = arith.constant 0 : i32
    return %arg0, %arg1, %arg2, %c0_i32, %c0_i32_0, %c0_i32_1 : i32, i32, i32, i32, i32, i32
  }
}

</mosaic_0001>

<llo_original>
// kernel: tpu_custom_call.1
$region0: #{tpu_custom_call.1}
  #allocation0 [shape = 'u32[]', space=smem, size = 0x4, offset = 0x4, fixed_abs, tag = 'smem constant byte address 0x4 - core index']
  #allocation1 [shape = 'u32[144,128]{1,0:T(1,128)}', space=vmem, size = 0x12000, scoped, tag = 'internal scratch']
  %s0 = inlined_call_operand.hbm [shape: f32[2,2,8,4,8,8], index: 0, kind: input, shape index: {}]
  %s1 = inlined_call_operand.hbm [shape: f32[16,16], index: 1, kind: input, shape index: {}]
  %s2 = inlined_call_operand.hbm [shape: f32[2,2,4,2,8,32], index: 2, kind: output, shape index: {}]
  %s3 = sld [smem:[#allocation0]]
  $region49: #{tpu_custom_call.1} parent=0
    _
  %s5 = ssub.s32 1, %s3
  %s6 = scalar_select 0, %s5, %s3
  $region1: #{tpu_custom_call.1} parent=0
    #allocation2 [shape = 'u8[262144]{0}', space=vmem, size = 0x40000, scoped, tag = 'input window, operand 0']
    #allocation3 [shape = 's32[2]{0}', space=sflag, size = 0x8, scoped, tag = 'scoped memory for tpu_custom_call.1']
    #allocation4 [shape = 's32[2]{0}', space=sflag, size = 0x8, scoped, tag = 'scoped memory for tpu_custom_call.1']
    #allocation5 [shape = 'u8[8192]{0}', space=vmem, size = 0x2000, scoped, tag = 'input window, operand 1, single buffered']
    #allocation6 [shape = 's32[1]{0}', space=sflag, size = 0x4, scoped, tag = 'scoped memory for tpu_custom_call.1']
    #allocation7 [shape = 'u8[65536]{0}', space=vmem, size = 0x10000, scoped, tag = 'output window, operand 0']
    %7 = vsyncpa [#allocation3], 0
    %s8 = scalar_lea.sflag [#allocation3], 1
    %9 = vsyncpa %s8, 0
    %10 = vsyncpa [#allocation6], 0
    %11 = vsyncpa [#allocation4], 0
    %s12 = scalar_lea.sflag [#allocation4], 1
    %13 = vsyncpa %s12, 0
    loop: start=0, step=1, limit=6
    $region2: #{tpu_custom_call.1} parent=1 // loop_pre_header
      _
    $region3: #{tpu_custom_call.1} parent=1 // loop_header
      %s15 = sphi 0, %s19
      %p16 = scmp.ge.s32.totalorder %s15, 6
      %s22 = sphi 0, %s41
      %s23 = sphi 0, %s37
      %s24 = sphi 0, %s33
      %s25 = sphi 0, %s22
      %s26 = sphi 0, %s23
      %s27 = sphi 0, %s24
      %s28 = sphi 0, %s25
      %s29 = sphi 0, %s26
      %s30 = sphi 0, %s27
      %s48 = sphi 0, %s50
      %s51 = sphi 0, %s48
      %s52 = sphi 0, %s51
      %s68 = sphi 0, %s52
      %s72 = sphi 0, %s72
      %s74 = sphi 0, %s72
      %s75 = sphi 0, %s74
      %s89 = sphi 0, %s75
      %s99 = sphi 0, %s101
      %s102 = sphi 0, %s99
      %s103 = sphi 0, %s102
      %s119 = sphi 0, %s103
    $region4: #{tpu_custom_call.1} parent=1 // loop_header_branch
      %18 = sbr.rel (%p16) target = $region8
    $region5: #{tpu_custom_call.1} parent=1 // loop_body
      %s20 = ssub.s32 %s15, 1
      %s21 = ssub.s32 %s15, 2
      %s31 = sadd.s32 1, %s24
      %p32 = scmp.ge.s32.totalorder %s31, 1
      %s33 = scalar_select %p32, 0, %s31
      %s34 = sadd.s32 1, %s23
      %s35 = scalar_select %p32, %s34, %s23
      %p36 = scmp.ge.s32.totalorder %s35, 2
      %s37 = scalar_select %p36, 0, %s35
      %s38 = sadd.s32 1, %s22
      %s39 = scalar_select %p36, %s38, %s22
      %p40 = scmp.ge.s32.totalorder %s39, 2
      %s41 = scalar_select %p40, 0, %s39
      %s42 = ssub.s32 %s22, %s41
      %s43 = ssub.s32 %s23, %s37
      %s44 = sor.u32 %s42, %s43
      %s45 = ssub.s32 %s24, %s33
      %s46 = sor.u32 %s44, %s45
      %p47 = scmp.eq.s32.totalorder %s46, 0
      %s49 = sadd.s32 %s48, 1
      %s50 = scalar_select %p47, %s48, %s49
      %p53 = pneg %p47
      %p54 = scmp.eq.s32.totalorder %s15, 3
      %p55 = por %p53, %p54
      %p56 = scmp.ne.s32.totalorder %s48, %s51
      %p57 = scmp.eq.s32.totalorder %s15, 0
      %p58 = por %p56, %p57
      %p59 = scmp.ne.s32.totalorder %s48, %s51
      %p60 = scmp.eq.s32.totalorder %s20, 3
      %p61 = por %p59, %p60
      %p62 = scmp.ne.s32.totalorder %s51, %s52
      %p63 = scmp.eq.s32.totalorder %s20, 0
      %p64 = por %p62, %p63
      %p65 = scmp.ne.s32.totalorder %s51, %s52
      %p66 = scmp.eq.s32.totalorder %s21, 3
      %p67 = por %p65, %p66
      %p69 = scmp.ne.s32.totalorder %s52, %s68
      %p70 = scmp.eq.s32.totalorder %s21, 0
      %p71 = por %p69, %p70
      %s73 = sadd.s32 %s72, 1
      %p76 = scmp.eq.s32.totalorder %s15, 3
      %p77 = scmp.ne.s32.totalorder %s72, %s74
      %p78 = scmp.eq.s32.totalorder %s15, 0
      %p79 = por %p77, %p78
      %p80 = scmp.ne.s32.totalorder %s72, %s74
      %p81 = scmp.eq.s32.totalorder %s20, 3
      %p82 = por %p80, %p81
      %p83 = scmp.ne.s32.totalorder %s74, %s75
      %p84 = scmp.eq.s32.totalorder %s20, 0
      %p85 = por %p83, %p84
      %p86 = scmp.ne.s32.totalorder %s74, %s75
      %p87 = scmp.eq.s32.totalorder %s21, 3
      %p88 = por %p86, %p87
      %p90 = scmp.ne.s32.totalorder %s75, %s89
      %p91 = scmp.eq.s32.totalorder %s21, 0
      %p92 = por %p90, %p91
      %s93 = ssub.s32 %s22, %s41
      %s94 = ssub.s32 %s23, %s37
      %s95 = sor.u32 %s93, %s94
      %s96 = ssub.s32 %s24, %s33
      %s97 = sor.u32 %s95, %s96
      %p98 = scmp.eq.s32.totalorder %s97, 0
      %s100 = sadd.s32 %s99, 1
      %s101 = scalar_select %p98, %s99, %s100
      %p104 = pneg %p98
      %p105 = scmp.eq.s32.totalorder %s15, 3
      %p106 = por %p104, %p105
      %p107 = scmp.ne.s32.totalorder %s99, %s102
      %p108 = scmp.eq.s32.totalorder %s15, 0
      %p109 = por %p107, %p108
      %p110 = scmp.ne.s32.totalorder %s99, %s102
      %p111 = scmp.eq.s32.totalorder %s20, 3
      %p112 = por %p110, %p111
      %p113 = scmp.ne.s32.totalorder %s102, %s103
      %p114 = scmp.eq.s32.totalorder %s20, 0
      %p115 = por %p113, %p114
      %p116 = scmp.ne.s32.totalorder %s102, %s103
      %p117 = scmp.eq.s32.totalorder %s21, 3
      %p118 = por %p116, %p117
      %p120 = scmp.ne.s32.totalorder %s103, %s119
      %p121 = scmp.eq.s32.totalorder %s21, 0
      %p122 = por %p120, %p121
      %p123 = scmp.le.s32.totalorder 1, %s15
      %p124 = scmp.lt.s32.totalorder %s15, 5
      %p125 = pnand %p123, %p124
      %p126 = pneg %p125
      // Predicated region
      $region9: #{tpu_custom_call.1} parent=5 // pred_check
        _
      $region10: #{tpu_custom_call.1} parent=5 // pred_check_branch
        %128 = sbr.rel (%p125) target = $region12
      $region11: #{tpu_custom_call.1} parent=5 // pred_region
        %s129 = ssub.s32 %s15, 1
        // Predicated region
        $region13: #{tpu_custom_call.1} parent=11 // pred_check
          %p130 = pneg %p85
        $region14: #{tpu_custom_call.1} parent=11 // pred_check_branch
          %132 = sbr.rel (%p130) target = $region16
        $region15: #{tpu_custom_call.1} parent=11 // pred_region
          %s134 = ssub.s32 256, 256
          %135 = vsyncadd [#allocation6], %s134
          %s136 = sshll.u32 [#allocation5], 4
          %s137 = int_to_ptr.vmem [resolvable:$true] %s136
          %142 = dma.hbm_to_vmem [thread:$0]  %s1, 256, %s137, [#allocation6], 128, 128, 8
        $region16: #{tpu_custom_call.1} parent=11 // pred_fallthru
          _
      $region12: #{tpu_custom_call.1} parent=5 // pred_fallthru
        _
      %p143 = scmp.lt.s32.totalorder %s15, 4
      // Predicated region
      $region17: #{tpu_custom_call.1} parent=5 // pred_check
        %p144 = pneg %p143
      $region18: #{tpu_custom_call.1} parent=5 // pred_check_branch
        %146 = sbr.rel (%p144) target = $region20
      $region19: #{tpu_custom_call.1} parent=5 // pred_region
        // Predicated region
        $region21: #{tpu_custom_call.1} parent=19 // pred_check
          %p147 = pneg %p58
        $region22: #{tpu_custom_call.1} parent=19 // pred_check_branch
          %149 = sbr.rel (%p147) target = $region24
        $region23: #{tpu_custom_call.1} parent=19 // pred_region
          %s150 = sand.u32 %s48, 1
          %s151 = scalar_lea.sflag [#allocation3], %s150
          %s152 = sand.u32 %s48, 1
          %s153 = smul.addr %s152, 256
          %s154 = scalar_lea.vmem [#allocation2], %s153
          %s155 = smul.u32 4, %s24
          %s157 = ssub.s32 4096, 4096
          %158 = vsyncadd %s151, %s157
          %s159 = smul.addr %s23, 32
          %s160 = sadd.s32 %s155, %s159
          %s161 = smul.addr %s22, 64
          %s162 = sadd.s32 %s160, %s161
          %s163 = smul.addr %s162, 128
          %s164 = scalar_lea.hbm %s0, %s163
          %s165 = sshll.u32 %s154, 4
          %s166 = int_to_ptr.vmem [resolvable:$true] %s165
          %171 = dma.hbm_to_vmem [thread:$0]  %s164, 4096, %s166, %s151, 128, 128, 8
        $region24: #{tpu_custom_call.1} parent=19 // pred_fallthru
          _
      $region20: #{tpu_custom_call.1} parent=5 // pred_fallthru
        _
      %p172 = scmp.le.s32.totalorder 1, %s15
      %p173 = scmp.lt.s32.totalorder %s15, 5
      %p174 = pnand %p172, %p173
      %p175 = pneg %p174
      // Predicated region
      $region25: #{tpu_custom_call.1} parent=5 // pred_check
        _
      $region26: #{tpu_custom_call.1} parent=5 // pred_check_branch
        %177 = sbr.rel (%p174) target = $region28
      $region27: #{tpu_custom_call.1} parent=5 // pred_region
        %s178 = ssub.s32 %s15, 1
        %s179 = sand.u32 %s51, 1
        %s180 = scalar_lea.sflag [#allocation3], %s179
        %s181 = sand.u32 %s51, 1
        %s182 = smul.addr %s181, 256
        %s183 = scalar_lea.vmem [#allocation2], %s182
        // Predicated region
        $region29: #{tpu_custom_call.1} parent=27 // pred_check
          %p184 = pneg %p64
        $region30: #{tpu_custom_call.1} parent=27 // pred_check_branch
          %186 = sbr.rel (%p184) target = $region32
        $region31: #{tpu_custom_call.1} parent=27 // pred_region
          %187 = dma.done %s180, 4096
        $region32: #{tpu_custom_call.1} parent=27 // pred_fallthru
          _
        // Predicated region
        $region33: #{tpu_custom_call.1} parent=27 // pred_check
          %p188 = pneg %p85
        $region34: #{tpu_custom_call.1} parent=27 // pred_check_branch
          %190 = sbr.rel (%p188) target = $region36
        $region35: #{tpu_custom_call.1} parent=27 // pred_region
          %191 = dma.done [#allocation6], 256
        $region36: #{tpu_custom_call.1} parent=27 // pred_fallthru
          _
        %s192 = sand.u32 %s51, 1
        %s193 = scalar_lea.sflag [#allocation3], %s192
        %s194 = sand.u32 %s51, 1
        %s195 = smul.addr %s194, 256
        %s196 = scalar_lea.vmem [#allocation2], %s195
        %p197 = pneg %p64
        %p198 = pneg %p61
        %p199 = pneg %p85
        %p200 = pneg %p82
        %p201 = pneg %p115
        %p202 = pneg %p112
        %s203 = sand.u32 %s102, 1
        %s204 = scalar_lea.sflag [#allocation4], %s203
        %s205 = sand.u32 %s102, 1
        %s206 = smul.addr %s205, 64
        %s207 = scalar_lea.vmem [#allocation7], %s206
        %s208 = smul.u32 4, %s27
        %s209 = smul.u32 4, %s27
        %v210 = vld [vmem:[#allocation5] sm:$0xff]
        %v211 = vld [vmem:[#allocation5 + $0x8] sm:$0xff]
        %v212 = vld [vmem:[%s183] sm:$0xff]
        %v213 = vld [vmem:[%s183 + $0x8] sm:$0xff]
        %v214 = vld [vmem:[%s183 + $0x10] sm:$0xff]
        %v215 = vld [vmem:[%s183 + $0x18] sm:$0xff]
        %s216 = scalar_lea.vmem %s183, 32 [#allocation2]
        %v217 = vld [vmem:[%s216] sm:$0xff]
        %v218 = vld [vmem:[%s216 + $0x8] sm:$0xff]
        %v219 = vld [vmem:[%s216 + $0x10] sm:$0xff]
        %v220 = vld [vmem:[%s216 + $0x18] sm:$0xff]
        %225 = vrot.lane.b32.xlu0 %v217, 8
        %v226 = vpop.permute.xlu0 %225
        %227 = vrot.lane.b32.xlu0 %v218, 8
        %v228 = vpop.permute.xlu0 %227
        %229 = vrot.lane.b32.xlu0 %v219, 8
        %v230 = vpop.permute.xlu0 %229
        %231 = vrot.lane.b32.xlu0 %v220, 8
        %v232 = vpop.permute.xlu0 %231
        %vm237 = vcmask 64512
        %v238 = vsel %vm237, %v212, %v226
        %v239 = vsel %vm237, %v213, %v228
        %v240 = vsel %vm237, %v214, %v230
        %v241 = vsel %vm237, %v215, %v232
        %vm242 = vcmask 130048
        %v244 = vsel %vm242, %v238, 0
        %v247 = vsel %vm242, %v239, 0
        %v250 = vsel %vm242, %v240, 0
        %v253 = vsel %vm242, %v241, 0
        %255 = vmatprep.subr.mxu0 0.0
        %256 = vmatpush1.msra.mxu0 0.0
        %257 = vmatprep.subr.mxu0 0.0
        %258 = vmatpush1.msra.mxu0 0.0
        %259 = vmatprep.subr.mxu0 0.0
        %260 = vmatpush1.msra.mxu0 0.0
        %261 = vmatprep.subr.mxu0 0.0
        %262 = vmatpush1.msra.mxu0 0.0
        %263 = vmatprep.subr.mxu0 0.0
        %264 = vmatpush1.msra.mxu0 0.0
        %265 = vmatprep.subr.mxu0 0.0
        %266 = vmatpush1.msra.mxu0 0.0
        %267 = vmatprep.subr.mxu0 0.0
        %268 = vmatpush1.msra.mxu0 0.0
        %269 = vmatprep.subr.mxu0 0.0
        %270 = vmatpush1.msra.mxu0 0.0
        %271 = vmatprep.subr.mxu0 0.0
        %272 = vmatpush1.msra.mxu0 0.0
        %273 = vmatprep.subr.mxu0 0.0
        %274 = vmatpush1.msra.mxu0 0.0
        %275 = vmatprep.subr.mxu0 0.0
        %276 = vmatpush1.msra.mxu0 0.0
        %277 = vmatprep.subr.mxu0 0.0
        %278 = vmatpush1.msra.mxu0 0.0
        %279 = vmatprep.subr.mxu0 0.0
        %280 = vmatpush1.msra.mxu0 0.0
        %281 = vmatprep.subr.mxu0 0.0
        %282 = vmatpush1.msra.mxu0 0.0
        %283 = vmatprep.subr.mxu0 0.0
        %284 = vmatpush1.msra.mxu0 %v211
        %285 = vmatprep.subr.mxu0 0.0
        %286 = vmatpush1.msra.mxu0 %v210
        %287 = vmatprep.subr.mxu0 0.0
        %288 = vmatpush2.msra.mxu0 0.0
        %289 = vmatprep.subr.mxu0 0.0
        %290 = vmatpush2.msra.mxu0 0.0
        %291 = vmatprep.subr.mxu0 0.0
        %292 = vmatpush2.msra.mxu0 0.0
        %293 = vmatprep.subr.mxu0 0.0
        %294 = vmatpush2.msra.mxu0 0.0
        %295 = vmatprep.subr.mxu0 0.0
        %296 = vmatpush2.msra.mxu0 0.0
        %297 = vmatprep.subr.mxu0 0.0
        %298 = vmatpush2.msra.mxu0 0.0
        %299 = vmatprep.subr.mxu0 0.0
        %300 = vmatpush2.msra.mxu0 0.0
        %301 = vmatprep.subr.mxu0 0.0
        %302 = vmatpush2.msra.mxu0 0.0
        %303 = vmatprep.subr.mxu0 0.0
        %304 = vmatpush2.msra.mxu0 0.0
        %305 = vmatprep.subr.mxu0 0.0
        %306 = vmatpush2.msra.mxu0 0.0
        %307 = vmatprep.subr.mxu0 0.0
        %308 = vmatpush2.msra.mxu0 0.0
        %309 = vmatprep.subr.mxu0 0.0
        %310 = vmatpush2.msra.mxu0 0.0
        %311 = vmatprep.subr.mxu0 0.0
        %312 = vmatpush2.msra.mxu0 0.0
        %313 = vmatprep.subr.mxu0 0.0
        %314 = vmatpush2.msra.mxu0 0.0
        %315 = vmatprep.subr.mxu0 0.0
        %316 = vmatpush2.msra.mxu0 0.0
        %317 = vmatprep.subr.mxu0 0.0
        %318 = vmatpush2.msra.mxu0 0.0
        %319 = vmatprep.mubr.f32.mxu0 0.0
        %320 = vmatmul.mubr.f32.gmra.mxu0 %v244
        %v321 = vpop.f32.mrf.mxu0
        %v322 = vadd.f32 0.0, %v321
        %v323 = vpop.f32.mrf.mxu0
        %324 = vmatprep.mubr.f32.mxu0 0.0
        %325 = vmatmul.mubr.f32.gmra.mxu0 %v247
        %v326 = vpop.f32.mrf.mxu0
        %v327 = vadd.f32 0.0, %v326
        %v328 = vpop.f32.mrf.mxu0
        %329 = vmatprep.mubr.f32.mxu0 0.0
        %330 = vmatmul.mubr.f32.gmra.mxu0 %v250
        %v331 = vpop.f32.mrf.mxu0
        %v332 = vadd.f32 0.0, %v331
        %v333 = vpop.f32.mrf.mxu0
        %334 = vmatprep.mubr.f32.mxu0 0.0
        %335 = vmatmul.mubr.f32.gmra.mxu0 %v253
        %v336 = vpop.f32.mrf.mxu0
        %v337 = vadd.f32 0.0, %v336
        %v338 = vpop.f32.mrf.mxu0
        %339 = vdwg.mxu0
        %340 = vst.msk [vmem:[%s207] sm:$0xff] %vm242, %v322
        %341 = vst.msk [vmem:[%s207 + $0x10] sm:$0xff] %vm242, %v327
        %342 = vst.msk [vmem:[%s207 + $0x20] sm:$0xff] %vm242, %v332
        %343 = vst.msk [vmem:[%s207 + $0x30] sm:$0xff] %vm242, %v337
        %s344 = scalar_lea.vmem %s183, 64 [#allocation2]
        %v345 = vld [vmem:[%s344] sm:$0xff]
        %v346 = vld [vmem:[%s344 + $0x8] sm:$0xff]
        %v347 = vld [vmem:[%s344 + $0x10] sm:$0xff]
        %v348 = vld [vmem:[%s344 + $0x18] sm:$0xff]
        %s349 = scalar_lea.vmem %s183, 96 [#allocation2]
        %v350 = vld [vmem:[%s349] sm:$0xff]
        %v351 = vld [vmem:[%s349 + $0x8] sm:$0xff]
        %v352 = vld [vmem:[%s349 + $0x10] sm:$0xff]
        %v353 = vld [vmem:[%s349 + $0x18] sm:$0xff]
        %358 = vrot.lane.b32.xlu0 %v350, 8
        %v359 = vpop.permute.xlu0 %358
        %360 = vrot.lane.b32.xlu0 %v351, 8
        %v361 = vpop.permute.xlu0 %360
        %362 = vrot.lane.b32.xlu0 %v352, 8
        %v363 = vpop.permute.xlu0 %362
        %364 = vrot.lane.b32.xlu0 %v353, 8
        %v365 = vpop.permute.xlu0 %364
        %v370 = vsel %vm237, %v345, %v359
        %v371 = vsel %vm237, %v346, %v361
        %v372 = vsel %vm237, %v347, %v363
        %v373 = vsel %vm237, %v348, %v365
        %v375 = vsel %vm242, %v370, 0
        %v378 = vsel %vm242, %v371, 0
        %v381 = vsel %vm242, %v372, 0
        %v384 = vsel %vm242, %v373, 0
        %386 = vmatprep.subr.mxu0 0.0
        %387 = vmatpush1.msra.mxu0 0.0
        %388 = vmatprep.subr.mxu0 0.0
        %389 = vmatpush1.msra.mxu0 0.0
        %390 = vmatprep.subr.mxu0 0.0
        %391 = vmatpush1.msra.mxu0 0.0
        %392 = vmatprep.subr.mxu0 0.0
        %393 = vmatpush1.msra.mxu0 0.0
        %394 = vmatprep.subr.mxu0 0.0
        %395 = vmatpush1.msra.mxu0 0.0
        %396 = vmatprep.subr.mxu0 0.0
        %397 = vmatpush1.msra.mxu0 0.0
        %398 = vmatprep.subr.mxu0 0.0
        %399 = vmatpush1.msra.mxu0 0.0
        %400 = vmatprep.subr.mxu0 0.0
        %401 = vmatpush1.msra.mxu0 0.0
        %402 = vmatprep.subr.mxu0 0.0
        %403 = vmatpush1.msra.mxu0 0.0
        %404 = vmatprep.subr.mxu0 0.0
        %405 = vmatpush1.msra.mxu0 0.0
        %406 = vmatprep.subr.mxu0 0.0
        %407 = vmatpush1.msra.mxu0 0.0
        %408 = vmatprep.subr.mxu0 0.0
        %409 = vmatpush1.msra.mxu0 0.0
        %410 = vmatprep.subr.mxu0 0.0
        %411 = vmatpush1.msra.mxu0 0.0
        %412 = vmatprep.subr.mxu0 0.0
        %413 = vmatpush1.msra.mxu0 0.0
        %414 = vmatprep.subr.mxu0 0.0
        %415 = vmatpush1.msra.mxu0 %v211
        %416 = vmatprep.subr.mxu0 0.0
        %417 = vmatpush1.msra.mxu0 %v210
        %418 = vmatprep.subr.mxu0 0.0
        %419 = vmatpush2.msra.mxu0 0.0
        %420 = vmatprep.subr.mxu0 0.0
        %421 = vmatpush2.msra.mxu0 0.0
        %422 = vmatprep.subr.mxu0 0.0
        %423 = vmatpush2.msra.mxu0 0.0
        %424 = vmatprep.subr.mxu0 0.0
        %425 = vmatpush2.msra.mxu0 0.0
        %426 = vmatprep.subr.mxu0 0.0
        %427 = vmatpush2.msra.mxu0 0.0
        %428 = vmatprep.subr.mxu0 0.0
        %429 = vmatpush2.msra.mxu0 0.0
        %430 = vmatprep.subr.mxu0 0.0
        %431 = vmatpush2.msra.mxu0 0.0
        %432 = vmatprep.subr.mxu0 0.0
        %433 = vmatpush2.msra.mxu0 0.0
        %434 = vmatprep.subr.mxu0 0.0
        %435 = vmatpush2.msra.mxu0 0.0
        %436 = vmatprep.subr.mxu0 0.0
        %437 = vmatpush2.msra.mxu0 0.0
        %438 = vmatprep.subr.mxu0 0.0
        %439 = vmatpush2.msra.mxu0 0.0
        %440 = vmatprep.subr.mxu0 0.0
        %441 = vmatpush2.msra.mxu0 0.0
        %442 = vmatprep.subr.mxu0 0.0
        %443 = vmatpush2.msra.mxu0 0.0
        %444 = vmatprep.subr.mxu0 0.0
        %445 = vmatpush2.msra.mxu0 0.0
        %446 = vmatprep.subr.mxu0 0.0
        %447 = vmatpush2.msra.mxu0 0.0
        %448 = vmatprep.subr.mxu0 0.0
        %449 = vmatpush2.msra.mxu0 0.0
        %450 = vmatprep.mubr.f32.mxu0 0.0
        %451 = vmatmul.mubr.f32.gmra.mxu0 %v375
        %v452 = vpop.f32.mrf.mxu0
        %v453 = vadd.f32 0.0, %v452
        %v454 = vpop.f32.mrf.mxu0
        %455 = vmatprep.mubr.f32.mxu0 0.0
        %456 = vmatmul.mubr.f32.gmra.mxu0 %v378
        %v457 = vpop.f32.mrf.mxu0
        %v458 = vadd.f32 0.0, %v457
        %v459 = vpop.f32.mrf.mxu0
        %460 = vmatprep.mubr.f32.mxu0 0.0
        %461 = vmatmul.mubr.f32.gmra.mxu0 %v381
        %v462 = vpop.f32.mrf.mxu0
        %v463 = vadd.f32 0.0, %v462
        %v464 = vpop.f32.mrf.mxu0
        %465 = vmatprep.mubr.f32.mxu0 0.0
        %466 = vmatmul.mubr.f32.gmra.mxu0 %v384
        %v467 = vpop.f32.mrf.mxu0
        %v468 = vadd.f32 0.0, %v467
        %v469 = vpop.f32.mrf.mxu0
        %470 = vdwg.mxu0
        %475 = vrot.lane.b32.xlu0 %v453, 16
        %v476 = vpop.permute.xlu0 %475
        %477 = vrot.lane.b32.xlu0 %v458, 16
        %v478 = vpop.permute.xlu0 %477
        %479 = vrot.lane.b32.xlu0 %v463, 16
        %v480 = vpop.permute.xlu0 %479
        %481 = vrot.lane.b32.xlu0 %v468, 16
        %v482 = vpop.permute.xlu0 %481
        %vm487 = vcmask 261248
        %488 = vst.msk [vmem:[%s207] sm:$0xff] %vm487, %v476
        %489 = vst.msk [vmem:[%s207 + $0x10] sm:$0xff] %vm487, %v478
        %490 = vst.msk [vmem:[%s207 + $0x20] sm:$0xff] %vm487, %v480
        %491 = vst.msk [vmem:[%s207 + $0x30] sm:$0xff] %vm487, %v482
        %s492 = scalar_lea.vmem %s183, 128 [#allocation2]
        %v493 = vld [vmem:[%s492] sm:$0xff]
        %v494 = vld [vmem:[%s492 + $0x8] sm:$0xff]
        %v495 = vld [vmem:[%s492 + $0x10] sm:$0xff]
        %v496 = vld [vmem:[%s492 + $0x18] sm:$0xff]
        %s497 = scalar_lea.vmem %s183, 160 [#allocation2]
        %v498 = vld [vmem:[%s497] sm:$0xff]
        %v499 = vld [vmem:[%s497 + $0x8] sm:$0xff]
        %v500 = vld [vmem:[%s497 + $0x10] sm:$0xff]
        %v501 = vld [vmem:[%s497 + $0x18] sm:$0xff]
        %506 = vrot.lane.b32.xlu0 %v498, 8
        %v507 = vpop.permute.xlu0 %506
        %508 = vrot.lane.b32.xlu0 %v499, 8
        %v509 = vpop.permute.xlu0 %508
        %510 = vrot.lane.b32.xlu0 %v500, 8
        %v511 = vpop.permute.xlu0 %510
        %512 = vrot.lane.b32.xlu0 %v501, 8
        %v513 = vpop.permute.xlu0 %512
        %v518 = vsel %vm237, %v493, %v507
        %v519 = vsel %vm237, %v494, %v509
        %v520 = vsel %vm237, %v495, %v511
        %v521 = vsel %vm237, %v496, %v513
        %v523 = vsel %vm242, %v518, 0
        %v526 = vsel %vm242, %v519, 0
        %v529 = vsel %vm242, %v520, 0
        %v532 = vsel %vm242, %v521, 0
        %534 = vmatprep.subr.mxu0 0.0
        %535 = vmatpush1.msra.mxu0 0.0
        %536 = vmatprep.subr.mxu0 0.0
        %537 = vmatpush1.msra.mxu0 0.0
        %538 = vmatprep.subr.mxu0 0.0
        %539 = vmatpush1.msra.mxu0 0.0
        %540 = vmatprep.subr.mxu0 0.0
        %541 = vmatpush1.msra.mxu0 0.0
        %542 = vmatprep.subr.mxu0 0.0
        %543 = vmatpush1.msra.mxu0 0.0
        %544 = vmatprep.subr.mxu0 0.0
        %545 = vmatpush1.msra.mxu0 0.0
        %546 = vmatprep.subr.mxu0 0.0
        %547 = vmatpush1.msra.mxu0 0.0
        %548 = vmatprep.subr.mxu0 0.0
        %549 = vmatpush1.msra.mxu0 0.0
        %550 = vmatprep.subr.mxu0 0.0
        %551 = vmatpush1.msra.mxu0 0.0
        %552 = vmatprep.subr.mxu0 0.0
        %553 = vmatpush1.msra.mxu0 0.0
        %554 = vmatprep.subr.mxu0 0.0
        %555 = vmatpush1.msra.mxu0 0.0
        %556 = vmatprep.subr.mxu0 0.0
        %557 = vmatpush1.msra.mxu0 0.0
        %558 = vmatprep.subr.mxu0 0.0
        %559 = vmatpush1.msra.mxu0 0.0
        %560 = vmatprep.subr.mxu0 0.0
        %561 = vmatpush1.msra.mxu0 0.0
        %562 = vmatprep.subr.mxu0 0.0
        %563 = vmatpush1.msra.mxu0 %v211
        %564 = vmatprep.subr.mxu0 0.0
        %565 = vmatpush1.msra.mxu0 %v210
        %566 = vmatprep.subr.mxu0 0.0
        %567 = vmatpush2.msra.mxu0 0.0
        %568 = vmatprep.subr.mxu0 0.0
        %569 = vmatpush2.msra.mxu0 0.0
        %570 = vmatprep.subr.mxu0 0.0
        %571 = vmatpush2.msra.mxu0 0.0
        %572 = vmatprep.subr.mxu0 0.0
        %573 = vmatpush2.msra.mxu0 0.0
        %574 = vmatprep.subr.mxu0 0.0
        %575 = vmatpush2.msra.mxu0 0.0
        %576 = vmatprep.subr.mxu0 0.0
        %577 = vmatpush2.msra.mxu0 0.0
        %578 = vmatprep.subr.mxu0 0.0
        %579 = vmatpush2.msra.mxu0 0.0
        %580 = vmatprep.subr.mxu0 0.0
        %581 = vmatpush2.msra.mxu0 0.0
        %582 = vmatprep.subr.mxu0 0.0
        %583 = vmatpush2.msra.mxu0 0.0
        %584 = vmatprep.subr.mxu0 0.0
        %585 = vmatpush2.msra.mxu0 0.0
        %586 = vmatprep.subr.mxu0 0.0
        %587 = vmatpush2.msra.mxu0 0.0
        %588 = vmatprep.subr.mxu0 0.0
        %589 = vmatpush2.msra.mxu0 0.0
        %590 = vmatprep.subr.mxu0 0.0
        %591 = vmatpush2.msra.mxu0 0.0
        %592 = vmatprep.subr.mxu0 0.0
        %593 = vmatpush2.msra.mxu0 0.0
        %594 = vmatprep.subr.mxu0 0.0
        %595 = vmatpush2.msra.mxu0 0.0
        %596 = vmatprep.subr.mxu0 0.0
        %597 = vmatpush2.msra.mxu0 0.0
        %598 = vmatprep.mubr.f32.mxu0 0.0
        %599 = vmatmul.mubr.f32.gmra.mxu0 %v523
        %v600 = vpop.f32.mrf.mxu0
        %v601 = vadd.f32 0.0, %v600
        %v602 = vpop.f32.mrf.mxu0
        %603 = vmatprep.mubr.f32.mxu0 0.0
        %604 = vmatmul.mubr.f32.gmra.mxu0 %v526
        %v605 = vpop.f32.mrf.mxu0
        %v606 = vadd.f32 0.0, %v605
        %v607 = vpop.f32.mrf.mxu0
        %608 = vmatprep.mubr.f32.mxu0 0.0
        %609 = vmatmul.mubr.f32.gmra.mxu0 %v529
        %v610 = vpop.f32.mrf.mxu0
        %v611 = vadd.f32 0.0, %v610
        %v612 = vpop.f32.mrf.mxu0
        %613 = vmatprep.mubr.f32.mxu0 0.0
        %614 = vmatmul.mubr.f32.gmra.mxu0 %v532
        %v615 = vpop.f32.mrf.mxu0
        %v616 = vadd.f32 0.0, %v615
        %v617 = vpop.f32.mrf.mxu0
        %618 = vdwg.mxu0
        %s619 = scalar_lea.vmem %s207, 8 [#allocation7]
        %620 = vst.msk [vmem:[%s619] sm:$0xff] %vm242, %v601
        %621 = vst.msk [vmem:[%s619 + $0x10] sm:$0xff] %vm242, %v606
        %622 = vst.msk [vmem:[%s619 + $0x20] sm:$0xff] %vm242, %v611
        %623 = vst.msk [vmem:[%s619 + $0x30] sm:$0xff] %vm242, %v616
        %s624 = scalar_lea.vmem %s183, 192 [#allocation2]
        %v625 = vld [vmem:[%s624] sm:$0xff]
        %v626 = vld [vmem:[%s624 + $0x8] sm:$0xff]
        %v627 = vld [vmem:[%s624 + $0x10] sm:$0xff]
        %v628 = vld [vmem:[%s624 + $0x18] sm:$0xff]
        %s629 = scalar_lea.vmem %s183, 224 [#allocation2]
        %v630 = vld [vmem:[%s629] sm:$0xff]
        %v631 = vld [vmem:[%s629 + $0x8] sm:$0xff]
        %v632 = vld [vmem:[%s629 + $0x10] sm:$0xff]
        %v633 = vld [vmem:[%s629 + $0x18] sm:$0xff]
        %638 = vrot.lane.b32.xlu0 %v630, 8
        %v639 = vpop.permute.xlu0 %638
        %640 = vrot.lane.b32.xlu0 %v631, 8
        %v641 = vpop.permute.xlu0 %640
        %642 = vrot.lane.b32.xlu0 %v632, 8
        %v643 = vpop.permute.xlu0 %642
        %644 = vrot.lane.b32.xlu0 %v633, 8
        %v645 = vpop.permute.xlu0 %644
        %v650 = vsel %vm237, %v625, %v639
        %v651 = vsel %vm237, %v626, %v641
        %v652 = vsel %vm237, %v627, %v643
        %v653 = vsel %vm237, %v628, %v645
        %v655 = vsel %vm242, %v650, 0
        %v658 = vsel %vm242, %v651, 0
        %v661 = vsel %vm242, %v652, 0
        %v664 = vsel %vm242, %v653, 0
        %666 = vmatprep.subr.mxu0 0.0
        %667 = vmatpush1.msra.mxu0 0.0
        %668 = vmatprep.subr.mxu0 0.0
        %669 = vmatpush1.msra.mxu0 0.0
        %670 = vmatprep.subr.mxu0 0.0
        %671 = vmatpush1.msra.mxu0 0.0
        %672 = vmatprep.subr.mxu0 0.0
        %673 = vmatpush1.msra.mxu0 0.0
        %674 = vmatprep.subr.mxu0 0.0
        %675 = vmatpush1.msra.mxu0 0.0
        %676 = vmatprep.subr.mxu0 0.0
        %677 = vmatpush1.msra.mxu0 0.0
        %678 = vmatprep.subr.mxu0 0.0
        %679 = vmatpush1.msra.mxu0 0.0
        %680 = vmatprep.subr.mxu0 0.0
        %681 = vmatpush1.msra.mxu0 0.0
        %682 = vmatprep.subr.mxu0 0.0
        %683 = vmatpush1.msra.mxu0 0.0
        %684 = vmatprep.subr.mxu0 0.0
        %685 = vmatpush1.msra.mxu0 0.0
        %686 = vmatprep.subr.mxu0 0.0
        %687 = vmatpush1.msra.mxu0 0.0
        %688 = vmatprep.subr.mxu0 0.0
        %689 = vmatpush1.msra.mxu0 0.0
        %690 = vmatprep.subr.mxu0 0.0
        %691 = vmatpush1.msra.mxu0 0.0
        %692 = vmatprep.subr.mxu0 0.0
        %693 = vmatpush1.msra.mxu0 0.0
        %694 = vmatprep.subr.mxu0 0.0
        %695 = vmatpush1.msra.mxu0 %v211
        %696 = vmatprep.subr.mxu0 0.0
        %697 = vmatpush1.msra.mxu0 %v210
        %698 = vmatprep.subr.mxu0 0.0
        %699 = vmatpush2.msra.mxu0 0.0
        %700 = vmatprep.subr.mxu0 0.0
        %701 = vmatpush2.msra.mxu0 0.0
        %702 = vmatprep.subr.mxu0 0.0
        %703 = vmatpush2.msra.mxu0 0.0
        %704 = vmatprep.subr.mxu0 0.0
        %705 = vmatpush2.msra.mxu0 0.0
        %706 = vmatprep.subr.mxu0 0.0
        %707 = vmatpush2.msra.mxu0 0.0
        %708 = vmatprep.subr.mxu0 0.0
        %709 = vmatpush2.msra.mxu0 0.0
        %710 = vmatprep.subr.mxu0 0.0
        %711 = vmatpush2.msra.mxu0 0.0
        %712 = vmatprep.subr.mxu0 0.0
        %713 = vmatpush2.msra.mxu0 0.0
        %714 = vmatprep.subr.mxu0 0.0
        %715 = vmatpush2.msra.mxu0 0.0
        %716 = vmatprep.subr.mxu0 0.0
        %717 = vmatpush2.msra.mxu0 0.0
        %718 = vmatprep.subr.mxu0 0.0
        %719 = vmatpush2.msra.mxu0 0.0
        %720 = vmatprep.subr.mxu0 0.0
        %721 = vmatpush2.msra.mxu0 0.0
        %722 = vmatprep.subr.mxu0 0.0
        %723 = vmatpush2.msra.mxu0 0.0
        %724 = vmatprep.subr.mxu0 0.0
        %725 = vmatpush2.msra.mxu0 0.0
        %726 = vmatprep.subr.mxu0 0.0
        %727 = vmatpush2.msra.mxu0 0.0
        %728 = vmatprep.subr.mxu0 0.0
        %729 = vmatpush2.msra.mxu0 0.0
        %730 = vmatprep.mubr.f32.mxu0 0.0
        %731 = vmatmul.mubr.f32.gmra.mxu0 %v655
        %v732 = vpop.f32.mrf.mxu0
        %v733 = vadd.f32 0.0, %v732
        %v734 = vpop.f32.mrf.mxu0
        %735 = vmatprep.mubr.f32.mxu0 0.0
        %736 = vmatmul.mubr.f32.gmra.mxu0 %v658
        %v737 = vpop.f32.mrf.mxu0
        %v738 = vadd.f32 0.0, %v737
        %v739 = vpop.f32.mrf.mxu0
        %740 = vmatprep.mubr.f32.mxu0 0.0
        %741 = vmatmul.mubr.f32.gmra.mxu0 %v661
        %v742 = vpop.f32.mrf.mxu0
        %v743 = vadd.f32 0.0, %v742
        %v744 = vpop.f32.mrf.mxu0
        %745 = vmatprep.mubr.f32.mxu0 0.0
        %746 = vmatmul.mubr.f32.gmra.mxu0 %v664
        %v747 = vpop.f32.mrf.mxu0
        %v748 = vadd.f32 0.0, %v747
        %v749 = vpop.f32.mrf.mxu0
        %750 = vdwg.mxu0
        %755 = vrot.lane.b32.xlu0 %v733, 16
        %v756 = vpop.permute.xlu0 %755
        %757 = vrot.lane.b32.xlu0 %v738, 16
        %v758 = vpop.permute.xlu0 %757
        %759 = vrot.lane.b32.xlu0 %v743, 16
        %v760 = vpop.permute.xlu0 %759
        %761 = vrot.lane.b32.xlu0 %v748, 16
        %v762 = vpop.permute.xlu0 %761
        %767 = vst.msk [vmem:[%s619] sm:$0xff] %vm487, %v756
        %768 = vst.msk [vmem:[%s619 + $0x10] sm:$0xff] %vm487, %v758
        %769 = vst.msk [vmem:[%s619 + $0x20] sm:$0xff] %vm487, %v760
        %770 = vst.msk [vmem:[%s619 + $0x30] sm:$0xff] %vm487, %v762
        %s771 = sand.u32 %s102, 1
        %s772 = scalar_lea.sflag [#allocation4], %s771
        %s773 = sand.u32 %s102, 1
        %s774 = smul.addr %s773, 64
        %s775 = scalar_lea.vmem [#allocation7], %s774
        // Predicated region
        $region37: #{tpu_custom_call.1} parent=27 // pred_check
          %p776 = pneg %p112
        $region38: #{tpu_custom_call.1} parent=27 // pred_check_branch
          %778 = sbr.rel (%p776) target = $region40
        $region39: #{tpu_custom_call.1} parent=27 // pred_region
          %s779 = smul.u32 4, %s27
          %s781 = ssub.s32 1024, 1024
          %782 = vsyncadd %s772, %s781
          %s783 = smul.addr %s779, 2
          %s784 = smul.addr %s26, 8
          %s785 = sadd.s32 %s783, %s784
          %s786 = smul.addr %s25, 16
          %s787 = sadd.s32 %s785, %s786
          %s788 = smul.addr %s787, 128
          %s789 = scalar_lea.hbm %s2, %s788
          %s790 = sshll.u32 %s775, 4
          %s791 = int_to_ptr.vmem [resolvable:$true] %s790
          %796 = dma.vmem_to_hbm [thread:$0]  %s791, 1024, %s789, %s772, 128, 128, 8
        $region40: #{tpu_custom_call.1} parent=27 // pred_fallthru
          _
      $region28: #{tpu_custom_call.1} parent=5 // pred_fallthru
        _
      %p797 = scmp.le.s32.totalorder 2, %s15
      // Predicated region
      $region41: #{tpu_custom_call.1} parent=5 // pred_check
        %p798 = pneg %p797
      $region42: #{tpu_custom_call.1} parent=5 // pred_check_branch
        %800 = sbr.rel (%p798) target = $region44
      $region43: #{tpu_custom_call.1} parent=5 // pred_region
        %s801 = ssub.s32 %s15, 2
        // Predicated region
        $region45: #{tpu_custom_call.1} parent=43 // pred_check
          %p802 = pneg %p118
        $region46: #{tpu_custom_call.1} parent=43 // pred_check_branch
          %804 = sbr.rel (%p802) target = $region48
        $region47: #{tpu_custom_call.1} parent=43 // pred_region
          %s805 = sand.u32 %s103, 1
          %s806 = scalar_lea.sflag [#allocation4], %s805
          %s807 = sand.u32 %s103, 1
          %s808 = smul.addr %s807, 64
          %s809 = scalar_lea.vmem [#allocation7], %s808
          %810 = dma.done %s806, 1024
        $region48: #{tpu_custom_call.1} parent=43 // pred_fallthru
          _
      $region44: #{tpu_custom_call.1} parent=5 // pred_fallthru
        _
    $region6: #{tpu_custom_call.1} parent=1 // loop_footer
      %s19 = sadd.s32 1, %s15
    $region7: #{tpu_custom_call.1} parent=1 // loop_footer_branch
      %14 = sbr.rel target = $region3
    $region8: #{tpu_custom_call.1} parent=1 // loop_exit
      _
    %811 = vsyncpa [#allocation3], 1
    %s812 = scalar_lea.sflag [#allocation3], 1
    %813 = vsyncpa %s812, 1
    %814 = vsyncpa [#allocation6], 1
    %815 = vsyncpa [#allocation4], 1
    %s816 = scalar_lea.sflag [#allocation4], 1
    %817 = vsyncpa %s816, 1

</llo_original>
